<compile_context>
chip_gen: v7x
topology: tpu7x:2x2x1
jax: 0.10.0
libtpu: 0.0.40
codegen_flags: <defaults>
</compile_context>

<pallas_src>
import functools

import jax
import jax.numpy as jnp
from jax.experimental import pallas as pl
from jax.experimental.pallas import tpu as pltpu


def _layernorm_kernel(x_ref, gamma_ref, beta_ref, o_ref, *, eps):
    """Processes one (row_tile, feat) block.  The feature axis is never padded,
    so every column participates in the statistics."""
    x = x_ref[...].astype(jnp.float32)                     # (row_tile, F)
    feat = x.shape[-1]
    n = jnp.float32(feat)

    # Two-pass mean / unbiased variance (numerically robust; the block is
    # already resident in VMEM, so the second pass is free under the DMA
    # bottleneck).
    mean = jnp.sum(x, axis=-1, keepdims=True) / n
    diff = x - mean
    ddof_den = jnp.float32(max(feat - 1, 1))               # guard feat == 1
    var = jnp.sum(diff * diff, axis=-1, keepdims=True) / ddof_den
    std = jnp.sqrt(var)

    # Per-row exact reciprocal, broadcast-multiplied (no per-element divide).
    inv = pl.reciprocal(std + jnp.float32(eps), approx=False)

    gamma = gamma_ref[...].astype(jnp.float32)             # (1, F)
    beta = beta_ref[...].astype(jnp.float32)               # (1, F)
    o_ref[...] = (gamma * (diff * inv) + beta).astype(o_ref.dtype)


def _vmem_budget_and_limit():
    """Per-generation VMEM tile budget and scoped limit."""
    try:
        info = pltpu.get_tpu_info()
        vmem_cap = int(getattr(info, "vmem_capacity_bytes", 64 * 1024 * 1024))
    except Exception:
        vmem_cap = 64 * 1024 * 1024
    if vmem_cap >= 100 * 1024 * 1024:
        # v5e / v6e: 128 MiB physical -> bigger tiles for wide feature dims.
        return 48 * 1024 * 1024, 64 * 1024 * 1024
    # v7x (64 MiB per TC) or unknown: stay conservative.
    return 12 * 1024 * 1024, 32 * 1024 * 1024


def _choose_row_tile(rows, feat, itemsize, pack, vmem_budget_bytes):
    """Pick (row_tile, needs_padding) for the 1-D row grid.

    VMEM per pipeline row ~= 2x double-buffered (input + output) tiles in the
    input dtype plus ~2 f32 temporaries (upcast x and diff) live in-kernel.
    Prefer tiles that divide `rows` exactly (no wrapper pad / output slice =>
    no extra HBM passes) and an even grid length (balanced across v7x's 2 TCs).
    """
    per_row = feat * (4 * itemsize + 2 * 4)
    max_tile = int(vmem_budget_bytes // max(per_row, 1))
    max_tile = min(1024, max(pack, (max_tile // pack) * pack))

    # Whole array fits in one block: never pad.  Split into 2 equal steps if
    # that is possible without padding (keeps v7x's second TC busy).
    if rows <= max_tile:
        if rows >= 2 * pack and rows % (2 * pack) == 0:
            return rows // 2, False
        return rows, False        # block row dim == full array dim is legal

    # Search for an exact pack-aligned divisor near the VMEM target,
    # preferring an even step count (balance across 2 TCs on v7x).
    if rows % pack == 0:
        best_any = None
        best_even = None
        for t in range(max_tile, pack - 1, -pack):
            if rows % t == 0:
                if best_any is None:
                    best_any = t
                if (rows // t) % 2 == 0:
                    best_even = t
                    break          # largest even-step divisor found
        if best_even is not None and (best_any is None or 2 * best_even >= best_any):
            chosen = best_even
        else:
            chosen = best_any
        # Zero-copy beats padding unless the only divisors are tiny tiles.
        if chosen is not None and chosen >= min(256, max_tile):
            return chosen, False

    # Fallback: pad rows, but keep an even, near-equal grid.
    n_steps = max(2, -(-rows // max_tile))
    if n_steps % 2:
        n_steps += 1
    tile = -(-rows // n_steps)
    tile = max(pack, ((tile + pack - 1) // pack) * pack)
    return tile, True


def layer_norm(x, gamma, beta, eps=1e-6, row_tile=None):
    """x: (..., features); gamma/beta: (features,)."""
    orig_shape = x.shape
    feat = orig_shape[-1]
    x2 = x.reshape(-1, feat)                               # (rows, F)
    rows = x2.shape[0]

    itemsize = jnp.dtype(x.dtype).itemsize
    # Sublane pack: 8 rows for f32, 16 for bf16, 32 for 8-bit dtypes.
    pack = 8 * max(1, 4 // itemsize)

    vmem_budget, vmem_limit = _vmem_budget_and_limit()
    if row_tile is None:
        row_tile, _ = _choose_row_tile(rows, feat, itemsize, pack, vmem_budget)
    else:
        row_tile = max(1, int(row_tile))

    # Rows padded only on the fallback path (row_tile not dividing rows).
    rows_p = ((rows + row_tile - 1) // row_tile) * row_tile
    if rows_p != rows:
        x2 = jnp.pad(x2, ((0, rows_p - rows), (0, 0)))

    gamma2 = gamma.reshape(1, feat)
    beta2 = beta.reshape(1, feat)

    grid = (rows_p // row_tile,)
    kernel = functools.partial(_layernorm_kernel, eps=eps)

    out = pl.pallas_call(
        kernel,
        out_shape=jax.ShapeDtypeStruct((rows_p, feat), x.dtype),
        grid_spec=pltpu.PrefetchScalarGridSpec(
            num_scalar_prefetch=0,
            grid=grid,
            in_specs=[
                pl.BlockSpec((row_tile, feat), lambda i: (i, 0)),
                pl.BlockSpec((1, feat), lambda i: (0, 0)),
                pl.BlockSpec((1, feat), lambda i: (0, 0)),
            ],
            out_specs=pl.BlockSpec((row_tile, feat), lambda i: (i, 0)),
        ),
        compiler_params=pltpu.CompilerParams(
            dimension_semantics=("parallel",),
            vmem_limit_bytes=vmem_limit,
        ),
    )(x2, gamma2, beta2)

    if rows_p != rows:
        out = out[:rows]
    return out.reshape(orig_shape)


def _reference(x, gamma, beta, eps):
    mean = jnp.mean(x, axis=-1, keepdims=True)
    std = jnp.std(x, axis=-1, keepdims=True, ddof=1)
    return gamma * (x - mean) / (std + eps) + beta


if __name__ == "__main__":
    key = jax.random.PRNGKey(0)

    # Test 1: nicely aligned shapes (batch=2, seq=8, features=128) —
    # zero-copy, two-step grid (both TensorCores busy on v7x).
    batch, seq, features = 2, 8, 128
    x = jax.random.normal(key, (batch, seq, features), dtype=jnp.float32)
    gamma = jnp.ones((features,), dtype=jnp.float32)     # nn.Parameter(torch.ones)
    beta = jnp.zeros((features,), dtype=jnp.float32)     # nn.Parameter(torch.zeros)

    y = jax.block_until_ready(layer_norm(x, gamma, beta, eps=1e-6))
    ref = _reference(x, gamma, beta, 1e-6)
    assert jnp.allclose(y, ref, atol=1e-5, rtol=1e-5)

    # Test 2: ragged shapes (rows=15, feat=100) — single full-array block,
    # no padding anywhere (block dims equal full array dims).
    k2 = jax.random.PRNGKey(1)
    b2, s2, f2 = 3, 5, 100
    x2 = jax.random.normal(k2, (b2, s2, f2), dtype=jnp.float32)
    g2 = jnp.ones((f2,), dtype=jnp.float32)
    b2p = jnp.zeros((f2,), dtype=jnp.float32)
    y2 = jax.block_until_ready(layer_norm(x2, g2, b2p, eps=1e-6))
    ref2 = _reference(x2, g2, b2p, 1e-6)
    assert jnp.allclose(y2, ref2, atol=1e-5, rtol=1e-5)

    # Test 3: inputs with a large DC offset — exercises the two-pass variance
    # (the old one-pass s2 - s1*mean formulation would lose precision here).
    k3 = jax.random.PRNGKey(2)
    x3 = 1000.0 + 0.1 * jax.random.normal(k3, (2, 8, 128), dtype=jnp.float32)
    y3 = jax.block_until_ready(layer_norm(x3, gamma, beta, eps=1e-6))
    ref3 = _reference(x3, gamma, beta, 1e-6)
    assert jnp.allclose(y3, ref3, atol=1e-4, rtol=1e-4)

    print("KERNEL_OK")
</pallas_src>

<mosaic_0001>
module attributes {stable_mosaic.version = 11 : i64} {
  func.func @_layernorm_kernel(%arg0: i32, %arg1: memref<8x128xf32, #tpu.memory_space<vmem>>, %arg2: memref<1x128xf32, #tpu.memory_space<vmem>>, %arg3: memref<1x128xf32, #tpu.memory_space<vmem>>, %arg4: memref<8x128xf32, #tpu.memory_space<vmem>>) attributes {dimension_semantics = [#tpu.dimension_semantics<parallel>], iteration_bounds = array<i64: 2>, scalar_prefetch = 0 : i64, scratch_operands = 0 : i64, tpu.core_type = #tpu.core_type<tc>, window_params = [{transform_indices = @transform_0, window_bounds = array<i64: 8, 128>}, {pipeline_mode = #tpu.pipeline_mode<synchronous>, transform_indices = @transform_1, window_bounds = array<i64: 1, 128>}, {pipeline_mode = #tpu.pipeline_mode<synchronous>, transform_indices = @transform_2, window_bounds = array<i64: 1, 128>}, {transform_indices = @transform_3, window_bounds = array<i64: 8, 128>}]} {
    %c0 = arith.constant 0 : index
    %c0_0 = arith.constant 0 : index
    %0 = vector.load %arg1[%c0, %c0_0] : memref<8x128xf32, #tpu.memory_space<vmem>>, vector<8x128xf32>
    %cst = arith.constant dense<0.000000e+00> : vector<8xf32>
    %1 = vector.multi_reduction <add>, %0, %cst [1] : vector<8x128xf32> to vector<8xf32>
    %2 = vector.shape_cast %1 : vector<8xf32> to vector<8x1xf32>
    %cst_1 = arith.constant 1.280000e+02 : f32
    %3 = vector.broadcast %cst_1 : f32 to vector<8x1xf32>
    %4 = arith.divf %2, %3 : vector<8x1xf32>
    %5 = vector.broadcast %4 : vector<8x1xf32> to vector<8x128xf32>
    %6 = arith.subf %0, %5 : vector<8x128xf32>
    %7 = arith.mulf %6, %6 : vector<8x128xf32>
    %cst_2 = arith.constant dense<0.000000e+00> : vector<8xf32>
    %8 = vector.multi_reduction <add>, %7, %cst_2 [1] : vector<8x128xf32> to vector<8xf32>
    %9 = vector.shape_cast %8 : vector<8xf32> to vector<8x1xf32>
    %cst_3 = arith.constant 1.270000e+02 : f32
    %10 = vector.broadcast %cst_3 : f32 to vector<8x1xf32>
    %11 = arith.divf %9, %10 : vector<8x1xf32>
    %12 = math.sqrt %11 : vector<8x1xf32>
    %cst_4 = arith.constant 9.99999997E-7 : f32
    %13 = vector.broadcast %cst_4 : f32 to vector<8x1xf32>
    %14 = arith.addf %12, %13 : vector<8x1xf32>
    %15 = tpu.reciprocal %14 : vector<8x1xf32> -> vector<8x1xf32>
    %c0_5 = arith.constant 0 : index
    %c0_6 = arith.constant 0 : index
    %16 = vector.load %arg2[%c0_5, %c0_6] : memref<1x128xf32, #tpu.memory_space<vmem>>, vector<1x128xf32>
    %c0_7 = arith.constant 0 : index
    %c0_8 = arith.constant 0 : index
    %17 = vector.load %arg3[%c0_7, %c0_8] : memref<1x128xf32, #tpu.memory_space<vmem>>, vector<1x128xf32>
    %18 = vector.broadcast %15 : vector<8x1xf32> to vector<8x128xf32>
    %19 = arith.mulf %6, %18 : vector<8x128xf32>
    %20 = vector.broadcast %16 : vector<1x128xf32> to vector<8x128xf32>
    %21 = arith.mulf %20, %19 : vector<8x128xf32>
    %22 = vector.broadcast %17 : vector<1x128xf32> to vector<8x128xf32>
    %23 = arith.addf %21, %22 : vector<8x128xf32>
    %c0_9 = arith.constant 0 : index
    %c0_10 = arith.constant 0 : index
    %24 = vector.load %arg4[%c0_9, %c0_10] : memref<8x128xf32, #tpu.memory_space<vmem>>, vector<8x128xf32>
    tpu.vector_store %arg4[%c0_9, %c0_10], %23 {strides = array<i32>} : memref<8x128xf32, #tpu.memory_space<vmem>>, vector<8x128xf32>,
    return
  }
  func.func @transform_0(%arg0: i32) -> (i32, i32) {
    %c0_i32 = arith.constant 0 : i32
    %c0_i32_0 = arith.constant 0 : i32
    return %arg0, %c0_i32 : i32, i32
  }
  func.func @transform_1(%arg0: i32) -> (i32, i32) {
    %c0_i32 = arith.constant 0 : i32
    %c0_i32_0 = arith.constant 0 : i32
    %c0_i32_1 = arith.constant 0 : i32
    return %c0_i32, %c0_i32_0 : i32, i32
  }
  func.func @transform_2(%arg0: i32) -> (i32, i32) {
    %c0_i32 = arith.constant 0 : i32
    %c0_i32_0 = arith.constant 0 : i32
    %c0_i32_1 = arith.constant 0 : i32
    return %c0_i32, %c0_i32_0 : i32, i32
  }
  func.func @transform_3(%arg0: i32) -> (i32, i32) {
    %c0_i32 = arith.constant 0 : i32
    %c0_i32_0 = arith.constant 0 : i32
    return %arg0, %c0_i32 : i32, i32
  }
}

</mosaic_0001>

<llo_original>
// kernel: tpu_custom_call.1
$region0: #{tpu_custom_call.1}
  #allocation0 [shape = 'u32[]', space=smem, size = 0x4, offset = 0x4, fixed_abs, tag = 'smem constant byte address 0x4 - core index']
  #allocation1 [shape = 'u32[144,128]{1,0:T(1,128)}', space=vmem, size = 0x12000, scoped, tag = 'internal scratch']
  %s0 = inlined_call_operand.hbm [shape: f32[16,128], index: 0, kind: input, shape index: {}]
  %s1 = inlined_call_operand.vmem [shape: f32[1,128], index: 1, kind: input, shape index: {}]
  %s2 = inlined_call_operand.vmem [shape: f32[1,128], index: 2, kind: input, shape index: {}]
  %s3 = inlined_call_operand.hbm [shape: f32[16,128], index: 3, kind: output, shape index: {}]
  %s4 = sld [smem:[#allocation0]]
  $region49: #{tpu_custom_call.1} parent=0
    _
  %s6 = ssub.s32 1, %s4
  %s7 = scalar_select 0, %s6, %s4
  $region1: #{tpu_custom_call.1} parent=0
    #allocation2 [shape = 'u8[8192]{0}', space=vmem, size = 0x2000, scoped, tag = 'input window, operand 0']
    #allocation3 [shape = 's32[2]{0}', space=sflag, size = 0x8, scoped, tag = 'scoped memory for tpu_custom_call.1']
    #allocation4 [shape = 's32[2]{0}', space=sflag, size = 0x8, scoped, tag = 'scoped memory for tpu_custom_call.1']
    #allocation5 [shape = 'u8[8192]{0}', space=vmem, size = 0x2000, scoped, tag = 'output window, operand 0']
    %8 = vsyncpa [#allocation3], 0
    %s9 = scalar_lea.sflag [#allocation3], 1
    %10 = vsyncpa %s9, 0
    %11 = vsyncpa [#allocation4], 0
    %s12 = scalar_lea.sflag [#allocation4], 1
    %13 = vsyncpa %s12, 0
    loop: start=0, step=1, limit=4
    $region2: #{tpu_custom_call.1} parent=1 // loop_pre_header
      _
    $region3: #{tpu_custom_call.1} parent=1 // loop_header
      %s15 = sphi 0, %s19
      %p16 = scmp.ge.s32.totalorder %s15, 4
      %s25 = sphi 0, %s27
      %s28 = sphi 0, %s25
      %s29 = sphi 0, %s28
      %s45 = sphi 0, %s29
      %s49 = sphi 0, %s49
      %s51 = sphi 0, %s49
      %s52 = sphi 0, %s51
      %s66 = sphi 0, %s52
      %s70 = sphi 0, %s70
      %s72 = sphi 0, %s70
      %s73 = sphi 0, %s72
      %s87 = sphi 0, %s73
      %s93 = sphi 0, %s95
      %s96 = sphi 0, %s93
      %s97 = sphi 0, %s96
      %s113 = sphi 0, %s97
    $region4: #{tpu_custom_call.1} parent=1 // loop_header_branch
      %18 = sbr.rel (%p16) target = $region8
    $region5: #{tpu_custom_call.1} parent=1 // loop_body
      %s20 = ssub.s32 %s15, 1
      %s21 = ssub.s32 %s15, 2
      %s22 = sadd.s32 %s15, 1
      %s23 = ssub.s32 %s15, %s22
      %p24 = scmp.eq.s32.totalorder %s23, 0
      %s26 = sadd.s32 %s25, 1
      %s27 = scalar_select %p24, %s25, %s26
      %p30 = pneg %p24
      %p31 = scmp.eq.s32.totalorder %s15, 1
      %p32 = por %p30, %p31
      %p33 = scmp.ne.s32.totalorder %s25, %s28
      %p34 = scmp.eq.s32.totalorder %s15, 0
      %p35 = por %p33, %p34
      %p36 = scmp.ne.s32.totalorder %s25, %s28
      %p37 = scmp.eq.s32.totalorder %s20, 1
      %p38 = por %p36, %p37
      %p39 = scmp.ne.s32.totalorder %s28, %s29
      %p40 = scmp.eq.s32.totalorder %s20, 0
      %p41 = por %p39, %p40
      %p42 = scmp.ne.s32.totalorder %s28, %s29
      %p43 = scmp.eq.s32.totalorder %s21, 1
      %p44 = por %p42, %p43
      %p46 = scmp.ne.s32.totalorder %s29, %s45
      %p47 = scmp.eq.s32.totalorder %s21, 0
      %p48 = por %p46, %p47
      %s50 = sadd.s32 %s49, 1
      %p53 = scmp.eq.s32.totalorder %s15, 1
      %p54 = scmp.ne.s32.totalorder %s49, %s51
      %p55 = scmp.eq.s32.totalorder %s15, 0
      %p56 = por %p54, %p55
      %p57 = scmp.ne.s32.totalorder %s49, %s51
      %p58 = scmp.eq.s32.totalorder %s20, 1
      %p59 = por %p57, %p58
      %p60 = scmp.ne.s32.totalorder %s51, %s52
      %p61 = scmp.eq.s32.totalorder %s20, 0
      %p62 = por %p60, %p61
      %p63 = scmp.ne.s32.totalorder %s51, %s52
      %p64 = scmp.eq.s32.totalorder %s21, 1
      %p65 = por %p63, %p64
      %p67 = scmp.ne.s32.totalorder %s52, %s66
      %p68 = scmp.eq.s32.totalorder %s21, 0
      %p69 = por %p67, %p68
      %s71 = sadd.s32 %s70, 1
      %p74 = scmp.eq.s32.totalorder %s15, 1
      %p75 = scmp.ne.s32.totalorder %s70, %s72
      %p76 = scmp.eq.s32.totalorder %s15, 0
      %p77 = por %p75, %p76
      %p78 = scmp.ne.s32.totalorder %s70, %s72
      %p79 = scmp.eq.s32.totalorder %s20, 1
      %p80 = por %p78, %p79
      %p81 = scmp.ne.s32.totalorder %s72, %s73
      %p82 = scmp.eq.s32.totalorder %s20, 0
      %p83 = por %p81, %p82
      %p84 = scmp.ne.s32.totalorder %s72, %s73
      %p85 = scmp.eq.s32.totalorder %s21, 1
      %p86 = por %p84, %p85
      %p88 = scmp.ne.s32.totalorder %s73, %s87
      %p89 = scmp.eq.s32.totalorder %s21, 0
      %p90 = por %p88, %p89
      %s91 = ssub.s32 %s15, %s22
      %p92 = scmp.eq.s32.totalorder %s91, 0
      %s94 = sadd.s32 %s93, 1
      %s95 = scalar_select %p92, %s93, %s94
      %p98 = pneg %p92
      %p99 = scmp.eq.s32.totalorder %s15, 1
      %p100 = por %p98, %p99
      %p101 = scmp.ne.s32.totalorder %s93, %s96
      %p102 = scmp.eq.s32.totalorder %s15, 0
      %p103 = por %p101, %p102
      %p104 = scmp.ne.s32.totalorder %s93, %s96
      %p105 = scmp.eq.s32.totalorder %s20, 1
      %p106 = por %p104, %p105
      %p107 = scmp.ne.s32.totalorder %s96, %s97
      %p108 = scmp.eq.s32.totalorder %s20, 0
      %p109 = por %p107, %p108
      %p110 = scmp.ne.s32.totalorder %s96, %s97
      %p111 = scmp.eq.s32.totalorder %s21, 1
      %p112 = por %p110, %p111
      %p114 = scmp.ne.s32.totalorder %s97, %s113
      %p115 = scmp.eq.s32.totalorder %s21, 0
      %p116 = por %p114, %p115
      %p117 = scmp.le.s32.totalorder 1, %s15
      %p118 = scmp.lt.s32.totalorder %s15, 3
      %p119 = pnand %p117, %p118
      %p120 = pneg %p119
      // Predicated region
      $region9: #{tpu_custom_call.1} parent=5 // pred_check
        _
      $region10: #{tpu_custom_call.1} parent=5 // pred_check_branch
        %122 = sbr.rel (%p119) target = $region12
      $region11: #{tpu_custom_call.1} parent=5 // pred_region
        %s123 = ssub.s32 %s15, 1
        // Predicated region
        $region13: #{tpu_custom_call.1} parent=11 // pred_check
          %p124 = pneg %p62
        $region14: #{tpu_custom_call.1} parent=11 // pred_check_branch
          %126 = sbr.rel (%p124) target = $region16
        $region15: #{tpu_custom_call.1} parent=11 // pred_region
          _
        $region16: #{tpu_custom_call.1} parent=11 // pred_fallthru
          _
        // Predicated region
        $region17: #{tpu_custom_call.1} parent=11 // pred_check
          %p127 = pneg %p83
        $region18: #{tpu_custom_call.1} parent=11 // pred_check_branch
          %129 = sbr.rel (%p127) target = $region20
        $region19: #{tpu_custom_call.1} parent=11 // pred_region
          _
        $region20: #{tpu_custom_call.1} parent=11 // pred_fallthru
          _
      $region12: #{tpu_custom_call.1} parent=5 // pred_fallthru
        _
      %p130 = scmp.lt.s32.totalorder %s15, 2
      // Predicated region
      $region21: #{tpu_custom_call.1} parent=5 // pred_check
        %p131 = pneg %p130
      $region22: #{tpu_custom_call.1} parent=5 // pred_check_branch
        %133 = sbr.rel (%p131) target = $region24
      $region23: #{tpu_custom_call.1} parent=5 // pred_region
        // Predicated region
        $region25: #{tpu_custom_call.1} parent=23 // pred_check
          %p134 = pneg %p35
        $region26: #{tpu_custom_call.1} parent=23 // pred_check_branch
          %136 = sbr.rel (%p134) target = $region28
        $region27: #{tpu_custom_call.1} parent=23 // pred_region
          %s137 = sand.u32 %s25, 1
          %s138 = scalar_lea.sflag [#allocation3], %s137
          %s139 = sand.u32 %s25, 1
          %s140 = smul.addr %s139, 8
          %s141 = scalar_lea.vmem [#allocation2], %s140
          %s143 = ssub.s32 128, 128
          %144 = vsyncadd %s138, %s143
          %s145 = smul.addr %s15, 128
          %s146 = scalar_lea.hbm %s0, %s145
          %s148 = sshll.u32 %s141, 4
          %s149 = int_to_ptr.vmem [resolvable:$true] %s148
          %151 = dma.hbm_to_vmem [thread:$0]  %s146, 128, %s149, %s138
        $region28: #{tpu_custom_call.1} parent=23 // pred_fallthru
          _
      $region24: #{tpu_custom_call.1} parent=5 // pred_fallthru
        _
      %p152 = scmp.le.s32.totalorder 1, %s15
      %p153 = scmp.lt.s32.totalorder %s15, 3
      %p154 = pnand %p152, %p153
      %p155 = pneg %p154
      // Predicated region
      $region29: #{tpu_custom_call.1} parent=5 // pred_check
        _
      $region30: #{tpu_custom_call.1} parent=5 // pred_check_branch
        %157 = sbr.rel (%p154) target = $region32
      $region31: #{tpu_custom_call.1} parent=5 // pred_region
        %s158 = ssub.s32 %s15, 1
        %s159 = sand.u32 %s28, 1
        %s160 = scalar_lea.sflag [#allocation3], %s159
        %s161 = sand.u32 %s28, 1
        %s162 = smul.addr %s161, 8
        %s163 = scalar_lea.vmem [#allocation2], %s162
        // Predicated region
        $region33: #{tpu_custom_call.1} parent=31 // pred_check
          %p164 = pneg %p41
        $region34: #{tpu_custom_call.1} parent=31 // pred_check_branch
          %166 = sbr.rel (%p164) target = $region36
        $region35: #{tpu_custom_call.1} parent=31 // pred_region
          %167 = dma.done %s160, 128
        $region36: #{tpu_custom_call.1} parent=31 // pred_fallthru
          _
        %s168 = sand.u32 %s28, 1
        %s169 = scalar_lea.sflag [#allocation3], %s168
        %s170 = sand.u32 %s28, 1
        %s171 = smul.addr %s170, 8
        %s172 = scalar_lea.vmem [#allocation2], %s171
        %p173 = pneg %p41
        %p174 = pneg %p38
        %p175 = pneg %p62
        %p176 = pneg %p59
        %p177 = pneg %p83
        %p178 = pneg %p80
        %p179 = pneg %p109
        %p180 = pneg %p106
        %s181 = sand.u32 %s96, 1
        %s182 = scalar_lea.sflag [#allocation4], %s181
        %s183 = sand.u32 %s96, 1
        %s184 = smul.addr %s183, 8
        %s185 = scalar_lea.vmem [#allocation5], %s184
        %v186 = vld [vmem:[%s163] sm:$0xff]
        %187 = vadd.xlane.f32.xlu0 %v186
        %v188 = vpop.xlane.xlu0 %187
        %v189 = vrcp.pop 128.0
        %v190 = vmul.f32 %v188, %v189
        %v191 = vsub.f32 %v186, %v190
        %v192 = vmul.f32 %v191, %v191
        %193 = vadd.xlane.f32.xlu0 %v192
        %v194 = vpop.xlane.xlu0 %193
        %v195 = vrcp.pop 127.0
        %v196 = vmul.f32 %v194, %v195
        %v197 = vrsqrt.pop %v196
        %v198 = vmul.f32 %v196, %v197
        %vm199 = vcmp.eq.f32.partialorder %v196, inf
        %v200 = vsel %vm199, %v196, %v198
        %vm201 = vcmp.eq.f32.partialorder %v196, 0.0
        %v202 = vand.u32 %v196, 2147483648
        %v203 = vsel %vm201, %v202, %v200
        %v204 = vadd.f32 %v203, 1e-06
        %v205 = vrcp.pop %v204
        %v206 = vld [vmem:[%s1] sm:$0x1]
        %v207 = vld [vmem:[%s2] sm:$0x1]
        %v208 = vmul.f32 %v191, %v205
        %v210 = vlaneseq
        %v211 = vshrl.u32 %v210, 7
        %v212 = vsub.s32 0, %v211
        %v213 = vrot.slane %v206, %v212
        %v215 = vmul.f32 %v213, %v208
        %v217 = vlaneseq
        %v218 = vshrl.u32 %v217, 7
        %v219 = vsub.s32 0, %v218
        %v220 = vrot.slane %v207, %v219
        %v222 = vadd.f32 %v215, %v220
        %223 = vst [vmem:[%s185] sm:$0xff] %v222
        %s224 = sand.u32 %s96, 1
        %s225 = scalar_lea.sflag [#allocation4], %s224
        %s226 = sand.u32 %s96, 1
        %s227 = smul.addr %s226, 8
        %s228 = scalar_lea.vmem [#allocation5], %s227
        // Predicated region
        $region37: #{tpu_custom_call.1} parent=31 // pred_check
          %p229 = pneg %p106
        $region38: #{tpu_custom_call.1} parent=31 // pred_check_branch
          %231 = sbr.rel (%p229) target = $region40
        $region39: #{tpu_custom_call.1} parent=31 // pred_region
          %s233 = ssub.s32 128, 128
          %234 = vsyncadd %s225, %s233
          %s235 = smul.addr %s20, 128
          %s236 = scalar_lea.hbm %s3, %s235
          %s238 = sshll.u32 %s228, 4
          %s239 = int_to_ptr.vmem [resolvable:$true] %s238
          %241 = dma.vmem_to_hbm [thread:$0]  %s239, 128, %s236, %s225
        $region40: #{tpu_custom_call.1} parent=31 // pred_fallthru
          _
      $region32: #{tpu_custom_call.1} parent=5 // pred_fallthru
        _
      %p242 = scmp.le.s32.totalorder 2, %s15
      // Predicated region
      $region41: #{tpu_custom_call.1} parent=5 // pred_check
        %p243 = pneg %p242
      $region42: #{tpu_custom_call.1} parent=5 // pred_check_branch
        %245 = sbr.rel (%p243) target = $region44
      $region43: #{tpu_custom_call.1} parent=5 // pred_region
        %s246 = ssub.s32 %s15, 2
        // Predicated region
        $region45: #{tpu_custom_call.1} parent=43 // pred_check
          %p247 = pneg %p112
        $region46: #{tpu_custom_call.1} parent=43 // pred_check_branch
          %249 = sbr.rel (%p247) target = $region48
        $region47: #{tpu_custom_call.1} parent=43 // pred_region
          %s250 = sand.u32 %s97, 1
          %s251 = scalar_lea.sflag [#allocation4], %s250
          %s252 = sand.u32 %s97, 1
          %s253 = smul.addr %s252, 8
          %s254 = scalar_lea.vmem [#allocation5], %s253
          %255 = dma.done %s251, 128
        $region48: #{tpu_custom_call.1} parent=43 // pred_fallthru
          _
      $region44: #{tpu_custom_call.1} parent=5 // pred_fallthru
        _
    $region6: #{tpu_custom_call.1} parent=1 // loop_footer
      %s19 = sadd.s32 1, %s15
    $region7: #{tpu_custom_call.1} parent=1 // loop_footer_branch
      %14 = sbr.rel target = $region3
    $region8: #{tpu_custom_call.1} parent=1 // loop_exit
      _
    %256 = vsyncpa [#allocation3], 1
    %s257 = scalar_lea.sflag [#allocation3], 1
    %258 = vsyncpa %s257, 1
    %259 = vsyncpa [#allocation4], 1
    %s260 = scalar_lea.sflag [#allocation4], 1
    %261 = vsyncpa %s260, 1

</llo_original>
